<compile_context>
chip_gen: v7x
topology: tpu7x:2x2x1
jax: 0.10.0
libtpu: 0.0.40
codegen_flags: <defaults>
</compile_context>

<pallas_src>
import functools

import jax
import jax.numpy as jnp
from jax import lax
from jax.experimental import pallas as pl
from jax.experimental.pallas import tpu as pltpu


def _round_up(x, m):
    return (x + m - 1) // m * m


@functools.lru_cache(maxsize=None)
def _vmem_capacity_bytes():
    """Per-TensorCore VMEM capacity; conservative fallback if unknown."""
    try:
        return int(pltpu.get_tpu_info().vmem_capacity_bytes)
    except Exception:
        return 64 << 20   # assume the smallest (v7x-sized) VMEM


def _vmem_estimate(tm, kp, tn):
    """Footprint of one grid step, including in-kernel f32 temporaries."""
    return (2 * tm * kp * 2        # bf16 token tile, double buffered
            + 2 * tm * tn * 2      # bf16 output tile, double buffered
            + 2 * kp * tn * 2      # bf16 weight block (worst case 2 buffers)
            + 2 * 8 * tn * 4       # f32 bias block (sublane padded), 2 buffers
            + 3 * tm * kp * 4      # f32 temporaries: x upcast, x*x, xn
            + tm * kp * 2          # bf16 copy of xn fed to the MXU
            + tm * tn * 4)         # f32 matmul accumulator


def _choose_tiles(M, Kp, Dp0, vmem_cap):
    """Pick (tm, tn): token tile rows and output-column tile width."""
    budget = int(vmem_cap * 0.7)
    # 512-row tiles on 128 MiB parts (v5e/v6e); 256 on 64 MiB parts (v7x).
    tm_target = 512 if vmem_cap >= (96 << 20) else 256
    tm = min(tm_target, _round_up(M, 8))

    cands = [c for c in (Dp0, 2048, 1024, 512, 256, 128)
             if c <= Dp0 and c % 128 == 0]
    fits = [c for c in cands if _vmem_estimate(tm, Kp, c) <= budget]
    if fits:
        exact = [c for c in fits if Dp0 % c == 0]   # prefer no extra D padding
        tn = exact[0] if exact else fits[0]
    else:
        tn = 128
        while _vmem_estimate(tm, Kp, tn) > budget and tm > 8:
            tm = _round_up(max(8, tm // 2), 8)
    return int(tm), int(tn)


# ---------------------------------------------------------------------------
# Pallas kernel: fused LayerNorm + Linear over a (tm, Kp) tile of tokens.
#   x_ref : (tm, Kp)  bf16 tokens (K zero-padded to Kp)
#   w_ref : (Kp, tn)  bf16 LN-folded weight block (zero-padded rows/cols)
#   b_ref : (1, tn)   f32  LN-folded bias block
#   o_ref : (tm, tn)  bf16 output (lane-dense: tn multiple of 128)
# ---------------------------------------------------------------------------
def _spt_ln_linear_kernel(x_ref, w_ref, b_ref, o_ref, *, eps, true_k):
    x = x_ref[...].astype(jnp.float32)                       # (tm, Kp) f32
    inv_k = 1.0 / float(true_k)

    # Single-pass LayerNorm statistics with the TRUE patch_dim divisor.
    # Padded columns of x are zero, so both raw sums are already correct.
    mean = jnp.sum(x, axis=-1, keepdims=True) * inv_k        # (tm, 1)
    ex2 = jnp.sum(x * x, axis=-1, keepdims=True) * inv_k
    var = jnp.maximum(ex2 - mean * mean, 0.0)                # clamp: E[x^2]-m^2
    xn = (x - mean) * lax.rsqrt(var + eps)                   # f32 LN

    # LN affine is folded into w/b outside the kernel.  Padded K rows of the
    # weight are zero, so the (nonzero) padded columns of xn do not contribute.
    y = jnp.dot(xn.astype(jnp.bfloat16), w_ref[...],
                preferred_element_type=jnp.float32)          # (tm, tn) f32
    y = y + b_ref[...]
    o_ref[...] = y.astype(o_ref.dtype)


_BUFFERED_INVARIANTS = None   # one-shot cached capability decision


def _ln_linear_pallas(tokens, gamma, beta, w, b, *, eps=1e-5):
    """tokens: (M, K) -> (M, D) bf16: per-row LN(gamma,beta) then tokens@w + b."""
    global _BUFFERED_INVARIANTS
    M, K = tokens.shape
    D = w.shape[1]

    # Fold the LayerNorm affine into the linear layer (exact, done in f32):
    #   (xn*gamma + beta) @ W + b == xn @ (gamma[:,None]*W) + (beta @ W + b)
    w32 = w.astype(jnp.float32)
    w_fold = gamma.reshape(-1, 1).astype(jnp.float32) * w32          # (K, D)
    b_fold = (beta.astype(jnp.float32) @ w32
              + b.astype(jnp.float32)).reshape(1, D)                 # (1, D)

    # Lane / MXU alignment and tile selection (generation-aware VMEM budget).
    Kp = _round_up(K, 128)
    Dp0 = _round_up(D, 128)
    vmem_cap = _vmem_capacity_bytes()
    tm, tn = _choose_tiles(M, Kp, Dp0, vmem_cap)
    Mp = _round_up(M, tm)
    Dp = _round_up(Dp0, tn)

    tokens_p = tokens.astype(jnp.bfloat16)
    if (Mp, Kp) != (M, K):
        tokens_p = jnp.pad(tokens_p, ((0, Mp - M), (0, Kp - K)))
    w_p = w_fold
    if (Kp, Dp) != (K, D):
        w_p = jnp.pad(w_p, ((0, Kp - K), (0, Dp - D)))
    w_p = w_p.astype(jnp.bfloat16)
    b_p = b_fold if Dp == D else jnp.pad(b_fold, ((0, 0), (0, Dp - D)))

    est = _vmem_estimate(tm, Kp, tn)
    vmem_bytes = int(est * 1.25) + (4 << 20)
    vmem_bytes = max(vmem_bytes, 32 << 20)
    vmem_bytes = min(vmem_bytes, int(vmem_cap * 0.85))   # never above device VMEM

    kernel = functools.partial(_spt_ln_linear_kernel, eps=eps, true_k=K)
    n_j = Dp // tn
    grid = (n_j, Mp // tm)   # D blocks outer, M blocks inner (weight streamed once)

    def build(single_buffer_invariants):
        if single_buffer_invariants and n_j == 1:
            # Grid-constant operands: keep a single VMEM copy.
            w_spec = pl.BlockSpec((Kp, tn), lambda j, i: (0, j),
                                  pipeline_mode=pl.Buffered(1))
            b_spec = pl.BlockSpec((1, tn), lambda j, i: (0, j),
                                  pipeline_mode=pl.Buffered(1))
        else:
            w_spec = pl.BlockSpec((Kp, tn), lambda j, i: (0, j))
            b_spec = pl.BlockSpec((1, tn), lambda j, i: (0, j))

        return pl.pallas_call(
            kernel,
            out_shape=jax.ShapeDtypeStruct((Mp, Dp), jnp.bfloat16),
            grid_spec=pltpu.PrefetchScalarGridSpec(
                num_scalar_prefetch=0,
                grid=grid,
                in_specs=[
                    pl.BlockSpec((tm, Kp), lambda j, i: (i, 0)),  # token tile
                    w_spec,                                       # folded weight
                    b_spec,                                       # folded bias
                ],
                out_specs=pl.BlockSpec((tm, tn), lambda j, i: (i, j)),
            ),
            compiler_params=pltpu.CompilerParams(
                dimension_semantics=("parallel", "parallel"),
                vmem_limit_bytes=vmem_bytes),
        )

    args = (tokens_p, w_p, b_p)
    if _BUFFERED_INVARIANTS is None:
        # One-shot capability decision (no per-call probe, no host sync).
        if not hasattr(pl, "Buffered"):
            _BUFFERED_INVARIANTS = False
            out = build(False)(*args)
        else:
            try:
                out = build(True)(*args)
                _BUFFERED_INVARIANTS = True
            except Exception:
                # pipeline_mode=pl.Buffered(1) unsupported on this jax build;
                # fall back once and remember (default double-buffered specs).
                _BUFFERED_INVARIANTS = False
                out = build(False)(*args)
    else:
        out = build(_BUFFERED_INVARIANTS)(*args)

    return out[:M, :D]


# ---------------------------------------------------------------------------
# Glue (plain JAX, bf16): F.pad-with-crop shifts, channel concat, rearrange.
# Built channel-last (NHWC) so the rearrange is a reshape + one axis swap.
# ---------------------------------------------------------------------------
def _pad_crop_nhwc(x, pads):
    """torch.nn.functional.pad semantics (last-dim-first, negative = crop),
    applied to an NHWC tensor.  pads = (w_left, w_right, h_top, h_bottom)."""
    wl, wr, ht, hb = pads
    x = jnp.pad(x, ((0, 0),
                    (max(ht, 0), max(hb, 0)),
                    (max(wl, 0), max(wr, 0)),
                    (0, 0)))
    H, W = x.shape[1], x.shape[2]
    h0, h1 = max(-ht, 0), H - max(-hb, 0)
    w0, w1 = max(-wl, 0), W - max(-wr, 0)
    return x[:, h0:h1, w0:w1, :]


def _pad_crop_nchw(x, pads):
    """Same, on NCHW (used only by the pure-JAX f32 reference)."""
    wl, wr, ht, hb = pads
    x = jnp.pad(x, ((0, 0), (0, 0),
                    (max(ht, 0), max(hb, 0)),
                    (max(wl, 0), max(wr, 0))))
    H, W = x.shape[2], x.shape[3]
    h0, h1 = max(-ht, 0), H - max(-hb, 0)
    w0, w1 = max(-wl, 0), W - max(-wr, 0)
    return x[:, :, h0:h1, w0:w1]


_SHIFTS = ((1, -1, 0, 0), (-1, 1, 0, 0), (0, 0, 1, -1), (0, 0, -1, 1))


def spt_forward(x, params, *, patch_size):
    """x: (B, C, H, W) NCHW  ->  (B, num_patches, dim) bf16."""
    B, C, H, W = x.shape
    p = patch_size
    assert H % p == 0 and W % p == 0

    # bf16 channel-last plumbing: half-width HBM copies for the 5x intermediate.
    xc = jnp.transpose(x.astype(jnp.bfloat16), (0, 2, 3, 1))     # (B, H, W, C)
    shifted = [_pad_crop_nhwc(xc, s) for s in _SHIFTS]
    x5 = jnp.concatenate([xc] + shifted, axis=-1)                # (B, H, W, 5C)
    C5 = x5.shape[-1]

    hp, wp = H // p, W // p
    # 'b (h p1) (w p2) c -> b (h w) (p1 p2 c)'  (matches the NCHW einops order)
    xr = x5.reshape(B, hp, p, wp, p, C5)
    xr = jnp.transpose(xr, (0, 1, 3, 2, 4, 5))                   # swap p1 <-> w
    num_patches = hp * wp
    patch_dim = p * p * C5
    tokens = xr.reshape(B * num_patches, patch_dim)              # (M, K) bf16

    out = _ln_linear_pallas(
        tokens,
        params["ln_gamma"], params["ln_beta"],
        params["w"], params["b"],
    )
    dim = params["w"].shape[1]
    return out.reshape(B, num_patches, dim)


def init_spt_params(key, *, dim, patch_size, channels):
    patch_dim = patch_size * patch_size * 5 * channels
    k_w, k_b = jax.random.split(key)
    bound = 1.0 / jnp.sqrt(patch_dim)
    # PyTorch Linear stores (dim, patch_dim); we store its transpose (patch_dim, dim).
    w = jax.random.uniform(k_w, (patch_dim, dim), jnp.float32, -bound, bound)
    b = jax.random.uniform(k_b, (1, dim), jnp.float32, -bound, bound)
    ln_gamma = jnp.ones((1, patch_dim), jnp.float32)
    ln_beta = jnp.zeros((1, patch_dim), jnp.float32)
    return {"ln_gamma": ln_gamma, "ln_beta": ln_beta, "w": w, "b": b}


# ---------------------------------------------------------------------------
# Reference (pure JAX, f32, NCHW path) — also cross-checks the NHWC re-layout.
# ---------------------------------------------------------------------------
def _reference(x, params, *, patch_size):
    B, C, H, W = x.shape
    p = patch_size
    shifted = [_pad_crop_nchw(x, s) for s in _SHIFTS]
    x5 = jnp.concatenate([x] + shifted, axis=1)
    C5 = x5.shape[1]
    xr = x5.reshape(B, C5, H // p, p, W // p, p)
    xr = jnp.transpose(xr, (0, 2, 4, 3, 5, 1))
    tokens = xr.reshape(B, (H // p) * (W // p), p * p * C5)
    mean = jnp.mean(tokens, axis=-1, keepdims=True)
    var = jnp.mean((tokens - mean) ** 2, axis=-1, keepdims=True)
    xn = (tokens - mean) / jnp.sqrt(var + 1e-5)
    xn = xn * params["ln_gamma"][0] + params["ln_beta"][0]
    return xn @ params["w"] + params["b"][0]


if __name__ == "__main__":
    B, C, H, W = 2, 4, 16, 16
    patch_size = 4
    dim = 32

    key = jax.random.PRNGKey(0)
    k_x, k_p = jax.random.split(key)
    x = jax.random.normal(k_x, (B, C, H, W), jnp.float32)
    params = init_spt_params(k_p, dim=dim, patch_size=patch_size, channels=C)

    out = spt_forward(x, params, patch_size=patch_size)
    out = jax.block_until_ready(out)

    ref = _reference(x, params, patch_size=patch_size)
    assert out.shape == (B, (H // patch_size) * (W // patch_size), dim)
    assert out.dtype == jnp.bfloat16
    # Kernel runs bf16 end-to-end (tokens in, MXU matmul with f32 accumulation,
    # bf16 output store); the reference is full f32 -> relaxed tolerance.
    out_f32 = out.astype(jnp.float32)
    max_err = float(jnp.max(jnp.abs(out_f32 - ref)))
    assert jnp.allclose(out_f32, ref, atol=7.5e-2, rtol=7.5e-2), max_err

    print("KERNEL_OK")
</pallas_src>

<mosaic_0001>
module attributes {stable_mosaic.version = 11 : i64} {
  func.func @_spt_ln_linear_kernel(%arg0: i32, %arg1: i32, %arg2: memref<32x384xbf16, #tpu.memory_space<vmem>>, %arg3: memref<384x128xbf16, #tpu.memory_space<vmem>>, %arg4: memref<1x128xf32, #tpu.memory_space<vmem>>, %arg5: memref<32x128xbf16, #tpu.memory_space<vmem>>) attributes {dimension_semantics = [#tpu.dimension_semantics<parallel>, #tpu.dimension_semantics<parallel>], iteration_bounds = array<i64: 1, 1>, scalar_prefetch = 0 : i64, scratch_operands = 0 : i64, tpu.core_type = #tpu.core_type<tc>, window_params = [{transform_indices = @transform_0, window_bounds = array<i64: 32, 384>}, {pipeline_mode = #tpu.pipeline_mode<synchronous>, transform_indices = @transform_1, window_bounds = array<i64: 384, 128>}, {pipeline_mode = #tpu.pipeline_mode<synchronous>, transform_indices = @transform_2, window_bounds = array<i64: 1, 128>}, {transform_indices = @transform_3, window_bounds = array<i64: 32, 128>}]} {
    %c0 = arith.constant 0 : index
    %c0_0 = arith.constant 0 : index
    %0 = vector.load %arg2[%c0, %c0_0] : memref<32x384xbf16, #tpu.memory_space<vmem>>, vector<32x384xbf16>
    %1 = arith.extf %0 : vector<32x384xbf16> to vector<32x384xf32>
    %cst = arith.constant dense<0.000000e+00> : vector<32xf32>
    %2 = vector.multi_reduction <add>, %1, %cst [1] : vector<32x384xf32> to vector<32xf32>
    %3 = vector.shape_cast %2 : vector<32xf32> to vector<32x1xf32>
    %cst_1 = arith.constant 3.125000e-03 : f32
    %4 = vector.broadcast %cst_1 : f32 to vector<32x1xf32>
    %5 = arith.mulf %3, %4 : vector<32x1xf32>
    %6 = arith.mulf %1, %1 : vector<32x384xf32>
    %cst_2 = arith.constant dense<0.000000e+00> : vector<32xf32>
    %7 = vector.multi_reduction <add>, %6, %cst_2 [1] : vector<32x384xf32> to vector<32xf32>
    %8 = vector.shape_cast %7 : vector<32xf32> to vector<32x1xf32>
    %cst_3 = arith.constant 3.125000e-03 : f32
    %9 = vector.broadcast %cst_3 : f32 to vector<32x1xf32>
    %10 = arith.mulf %8, %9 : vector<32x1xf32>
    %11 = arith.mulf %5, %5 : vector<32x1xf32>
    %12 = arith.subf %10, %11 : vector<32x1xf32>
    %cst_4 = arith.constant 0.000000e+00 : f32
    %13 = vector.broadcast %cst_4 : f32 to vector<32x1xf32>
    %14 = arith.maximumf %12, %13 : vector<32x1xf32>
    %15 = vector.broadcast %5 : vector<32x1xf32> to vector<32x384xf32>
    %16 = arith.subf %1, %15 : vector<32x384xf32>
    %cst_5 = arith.constant 9.99999974E-6 : f32
    %17 = vector.broadcast %cst_5 : f32 to vector<32x1xf32>
    %18 = arith.addf %14, %17 : vector<32x1xf32>
    %19 = math.rsqrt %18 : vector<32x1xf32>
    %20 = vector.broadcast %19 : vector<32x1xf32> to vector<32x384xf32>
    %21 = arith.mulf %16, %20 : vector<32x384xf32>
    %22 = arith.truncf %21 : vector<32x384xf32> to vector<32x384xbf16>
    %c0_6 = arith.constant 0 : index
    %c0_7 = arith.constant 0 : index
    %23 = vector.load %arg3[%c0_6, %c0_7] : memref<384x128xbf16, #tpu.memory_space<vmem>>, vector<384x128xbf16>
    %cst_8 = arith.constant dense<0.000000e+00> : vector<32x128xf32>
    %24 = tpu.matmul %22, %23, %cst_8 {dimension_numbers = #tpu.dot_dimension_numbers<[1], [0], [0], [1], [0, 0, 1, 1], [], []>} : vector<32x384xbf16>, vector<384x128xbf16>, vector<32x128xf32> -> vector<32x128xf32>
    %c0_9 = arith.constant 0 : index
    %c0_10 = arith.constant 0 : index
    %25 = vector.load %arg4[%c0_9, %c0_10] : memref<1x128xf32, #tpu.memory_space<vmem>>, vector<1x128xf32>
    %26 = vector.broadcast %25 : vector<1x128xf32> to vector<32x128xf32>
    %27 = arith.addf %24, %26 : vector<32x128xf32>
    %28 = arith.truncf %27 : vector<32x128xf32> to vector<32x128xbf16>
    %c0_11 = arith.constant 0 : index
    %c0_12 = arith.constant 0 : index
    %29 = vector.load %arg5[%c0_11, %c0_12] : memref<32x128xbf16, #tpu.memory_space<vmem>>, vector<32x128xbf16>
    tpu.vector_store %arg5[%c0_11, %c0_12], %28 {strides = array<i32>} : memref<32x128xbf16, #tpu.memory_space<vmem>>, vector<32x128xbf16>,
    return
  }
  func.func @transform_0(%arg0: i32, %arg1: i32) -> (i32, i32) {
    %c0_i32 = arith.constant 0 : i32
    %c0_i32_0 = arith.constant 0 : i32
    return %arg1, %c0_i32 : i32, i32
  }
  func.func @transform_1(%arg0: i32, %arg1: i32) -> (i32, i32) {
    %c0_i32 = arith.constant 0 : i32
    %c0_i32_0 = arith.constant 0 : i32
    return %c0_i32, %arg0 : i32, i32
  }
  func.func @transform_2(%arg0: i32, %arg1: i32) -> (i32, i32) {
    %c0_i32 = arith.constant 0 : i32
    %c0_i32_0 = arith.constant 0 : i32
    return %c0_i32, %arg0 : i32, i32
  }
  func.func @transform_3(%arg0: i32, %arg1: i32) -> (i32, i32) {
    %c0_i32 = arith.constant 0 : i32
    return %arg1, %arg0 : i32, i32
  }
}

module attributes {stable_mosaic.version = 11 : i64} {
  func.func @_spt_ln_linear_kernel(%arg0: i32, %arg1: i32, %arg2: memref<32x384xbf16, #tpu.memory_space<vmem>>, %arg3: memref<384x128xbf16, #tpu.memory_space<vmem>>, %arg4: memref<1x128xf32, #tpu.memory_space<vmem>>, %arg5: memref<32x128xbf16, #tpu.memory_space<vmem>>) attributes {dimension_semantics = [#tpu.dimension_semantics<parallel>, #tpu.dimension_semantics<parallel>], iteration_bounds = array<i64: 1, 1>, scalar_prefetch = 0 : i64, scratch_operands = 0 : i64, tpu.core_type = #tpu.core_type<tc>, window_params = [{transform_indices = @transform_0, window_bounds = array<i64: 32, 384>}, {transform_indices = @transform_1, window_bounds = array<i64: 384, 128>}, {transform_indices = @transform_2, window_bounds = array<i64: 1, 128>}, {transform_indices = @transform_3, window_bounds = array<i64: 32, 128>}]} {
    %c0 = arith.constant 0 : index
    %c0_0 = arith.constant 0 : index
    %0 = vector.load %arg2[%c0, %c0_0] : memref<32x384xbf16, #tpu.memory_space<vmem>>, vector<32x384xbf16>
    %1 = arith.extf %0 : vector<32x384xbf16> to vector<32x384xf32>
    %cst = arith.constant dense<0.000000e+00> : vector<32xf32>
    %2 = vector.multi_reduction <add>, %1, %cst [1] : vector<32x384xf32> to vector<32xf32>
    %3 = vector.shape_cast %2 : vector<32xf32> to vector<32x1xf32>
    %cst_1 = arith.constant 3.125000e-03 : f32
    %4 = vector.broadcast %cst_1 : f32 to vector<32x1xf32>
    %5 = arith.mulf %3, %4 : vector<32x1xf32>
    %6 = arith.mulf %1, %1 : vector<32x384xf32>
    %cst_2 = arith.constant dense<0.000000e+00> : vector<32xf32>
    %7 = vector.multi_reduction <add>, %6, %cst_2 [1] : vector<32x384xf32> to vector<32xf32>
    %8 = vector.shape_cast %7 : vector<32xf32> to vector<32x1xf32>
    %cst_3 = arith.constant 3.125000e-03 : f32
    %9 = vector.broadcast %cst_3 : f32 to vector<32x1xf32>
    %10 = arith.mulf %8, %9 : vector<32x1xf32>
    %11 = arith.mulf %5, %5 : vector<32x1xf32>
    %12 = arith.subf %10, %11 : vector<32x1xf32>
    %cst_4 = arith.constant 0.000000e+00 : f32
    %13 = vector.broadcast %cst_4 : f32 to vector<32x1xf32>
    %14 = arith.maximumf %12, %13 : vector<32x1xf32>
    %15 = vector.broadcast %5 : vector<32x1xf32> to vector<32x384xf32>
    %16 = arith.subf %1, %15 : vector<32x384xf32>
    %cst_5 = arith.constant 9.99999974E-6 : f32
    %17 = vector.broadcast %cst_5 : f32 to vector<32x1xf32>
    %18 = arith.addf %14, %17 : vector<32x1xf32>
    %19 = math.rsqrt %18 : vector<32x1xf32>
    %20 = vector.broadcast %19 : vector<32x1xf32> to vector<32x384xf32>
    %21 = arith.mulf %16, %20 : vector<32x384xf32>
    %22 = arith.truncf %21 : vector<32x384xf32> to vector<32x384xbf16>
    %c0_6 = arith.constant 0 : index
    %c0_7 = arith.constant 0 : index
    %23 = vector.load %arg3[%c0_6, %c0_7] : memref<384x128xbf16, #tpu.memory_space<vmem>>, vector<384x128xbf16>
    %cst_8 = arith.constant dense<0.000000e+00> : vector<32x128xf32>
    %24 = tpu.matmul %22, %23, %cst_8 {dimension_numbers = #tpu.dot_dimension_numbers<[1], [0], [0], [1], [0, 0, 1, 1], [], []>} : vector<32x384xbf16>, vector<384x128xbf16>, vector<32x128xf32> -> vector<32x128xf32>
    %c0_9 = arith.constant 0 : index
    %c0_10 = arith.constant 0 : index
    %25 = vector.load %arg4[%c0_9, %c0_10] : memref<1x128xf32, #tpu.memory_space<vmem>>, vector<1x128xf32>
    %26 = vector.broadcast %25 : vector<1x128xf32> to vector<32x128xf32>
    %27 = arith.addf %24, %26 : vector<32x128xf32>
    %28 = arith.truncf %27 : vector<32x128xf32> to vector<32x128xbf16>
    %c0_11 = arith.constant 0 : index
    %c0_12 = arith.constant 0 : index
    %29 = vector.load %arg5[%c0_11, %c0_12] : memref<32x128xbf16, #tpu.memory_space<vmem>>, vector<32x128xbf16>
    tpu.vector_store %arg5[%c0_11, %c0_12], %28 {strides = array<i32>} : memref<32x128xbf16, #tpu.memory_space<vmem>>, vector<32x128xbf16>,
    return
  }
  func.func @transform_0(%arg0: i32, %arg1: i32) -> (i32, i32) {
    %c0_i32 = arith.constant 0 : i32
    %c0_i32_0 = arith.constant 0 : i32
    return %arg1, %c0_i32 : i32, i32
  }
  func.func @transform_1(%arg0: i32, %arg1: i32) -> (i32, i32) {
    %c0_i32 = arith.constant 0 : i32
    %c0_i32_0 = arith.constant 0 : i32
    return %c0_i32, %arg0 : i32, i32
  }
  func.func @transform_2(%arg0: i32, %arg1: i32) -> (i32, i32) {
    %c0_i32 = arith.constant 0 : i32
    %c0_i32_0 = arith.constant 0 : i32
    return %c0_i32, %arg0 : i32, i32
  }
  func.func @transform_3(%arg0: i32, %arg1: i32) -> (i32, i32) {
    %c0_i32 = arith.constant 0 : i32
    return %arg1, %arg0 : i32, i32
  }
}

</mosaic_0001>

<llo_original>
// kernel: tpu_custom_call.1
$region0: #{tpu_custom_call.1}
  #allocation0 [shape = 'u32[]', space=smem, size = 0x4, offset = 0x4, fixed_abs, tag = 'smem constant byte address 0x4 - core index']
  #allocation1 [shape = 'u32[144,128]{1,0:T(1,128)}', space=vmem, size = 0x12000, scoped, tag = 'internal scratch']
  %s0 = inlined_call_operand.hbm [shape: bf16[32,384], index: 0, kind: input, shape index: {}]
  %s1 = inlined_call_operand.hbm [shape: bf16[384,128], index: 1, kind: input, shape index: {}]
  %s2 = inlined_call_operand.vmem [shape: f32[1,128], index: 2, kind: input, shape index: {}]
  %s3 = inlined_call_operand.hbm [shape: bf16[32,128], index: 3, kind: output, shape index: {}]
  %s4 = sld [smem:[#allocation0]]
  $region30: #{tpu_custom_call.1} parent=0
    _
  %s6 = ssub.s32 1, %s4
  %s7 = scalar_select 0, %s6, %s4
  $region1: #{tpu_custom_call.1} parent=0
    #allocation2 [shape = 'u8[24576]{0}', space=vmem, size = 0x6000, scoped, tag = 'input window, operand 0, single buffered']
    #allocation3 [shape = 's32[1]{0}', space=sflag, size = 0x4, scoped, tag = 'scoped memory for tpu_custom_call.1']
    #allocation4 [shape = 's32[1]{0}', space=sflag, size = 0x4, scoped, tag = 'scoped memory for tpu_custom_call.1']
    #allocation5 [shape = 'u8[98304]{0}', space=vmem, size = 0x18000, scoped, tag = 'input window, operand 1, single buffered']
    #allocation6 [shape = 's32[1]{0}', space=sflag, size = 0x4, scoped, tag = 'scoped memory for tpu_custom_call.1']
    #allocation7 [shape = 'u8[8192]{0}', space=vmem, size = 0x2000, scoped, tag = 'output window, operand 0, single buffered']
    %8 = vsyncpa [#allocation3], 0
    %9 = vsyncpa [#allocation6], 0
    %10 = vsyncpa [#allocation4], 0
    // Predicated region
    $region2: #{tpu_custom_call.1} parent=1 // pred_check
      _
    $region3: #{tpu_custom_call.1} parent=1 // pred_check_branch
      %12 = sbr.rel (0) target = $region5
    $region4: #{tpu_custom_call.1} parent=1 // pred_region
      %s14 = ssub.s32 768, 768
      %15 = vsyncadd [#allocation3], %s14
      %s16 = sshll.u32 [#allocation2], 4
      %s17 = int_to_ptr.vmem [resolvable:$true] %s16
      %22 = dma.hbm_to_vmem [thread:$0]  %s0, 768, %s17, [#allocation3], 192, 192, 12
    $region5: #{tpu_custom_call.1} parent=1 // pred_fallthru
      _
    // Predicated region
    $region6: #{tpu_custom_call.1} parent=1 // pred_check
      _
    $region7: #{tpu_custom_call.1} parent=1 // pred_check_branch
      %24 = sbr.rel (0) target = $region9
    $region8: #{tpu_custom_call.1} parent=1 // pred_region
      %s26 = ssub.s32 3072, 3072
      %27 = vsyncadd [#allocation6], %s26
      %s28 = sshll.u32 [#allocation5], 4
      %s29 = int_to_ptr.vmem [resolvable:$true] %s28
      %34 = dma.hbm_to_vmem [thread:$0]  %s1, 3072, %s29, [#allocation6], 64, 64, 4
    $region9: #{tpu_custom_call.1} parent=1 // pred_fallthru
      _
    // Predicated region
    $region10: #{tpu_custom_call.1} parent=1 // pred_check
      _
    $region11: #{tpu_custom_call.1} parent=1 // pred_check_branch
      %36 = sbr.rel (0) target = $region13
    $region12: #{tpu_custom_call.1} parent=1 // pred_region
      _
    $region13: #{tpu_custom_call.1} parent=1 // pred_fallthru
      _
    // Predicated region
    $region14: #{tpu_custom_call.1} parent=1 // pred_check
      _
    $region15: #{tpu_custom_call.1} parent=1 // pred_check_branch
      %38 = sbr.rel (0) target = $region17
    $region16: #{tpu_custom_call.1} parent=1 // pred_region
      %39 = dma.done [#allocation3], 768
    $region17: #{tpu_custom_call.1} parent=1 // pred_fallthru
      _
    // Predicated region
    $region18: #{tpu_custom_call.1} parent=1 // pred_check
      _
    $region19: #{tpu_custom_call.1} parent=1 // pred_check_branch
      %41 = sbr.rel (0) target = $region21
    $region20: #{tpu_custom_call.1} parent=1 // pred_region
      %42 = dma.done [#allocation6], 3072
    $region21: #{tpu_custom_call.1} parent=1 // pred_fallthru
      _
    %v44 = vld [vmem:[#allocation2] sm:$0xff]
    %v45 = vld [vmem:[#allocation2 + $0x8] sm:$0xf]
    %v46 = vld [vmem:[#allocation2 + $0xc] sm:$0xff]
    %v47 = vld [vmem:[#allocation2 + $0x14] sm:$0xf]
    %v48 = vld [vmem:[#allocation2 + $0x18] sm:$0xff]
    %v49 = vld [vmem:[#allocation2 + $0x20] sm:$0xf]
    %v50 = vld [vmem:[#allocation2 + $0x24] sm:$0xff]
    %v51 = vld [vmem:[#allocation2 + $0x2c] sm:$0xf]
    %v52 = vunpack.c.l.bf16 %v44
    %v53 = vunpack.c.h.bf16 %v44
    %v54 = vunpack.c.l.bf16 %v45
    %v55 = vunpack.c.l.bf16 %v46
    %v56 = vunpack.c.h.bf16 %v46
    %v57 = vunpack.c.l.bf16 %v47
    %v58 = vunpack.c.l.bf16 %v48
    %v59 = vunpack.c.h.bf16 %v48
    %v60 = vunpack.c.l.bf16 %v49
    %v61 = vunpack.c.l.bf16 %v50
    %v62 = vunpack.c.h.bf16 %v50
    %v63 = vunpack.c.l.bf16 %v51
    %v64 = vadd.f32 %v52, %v53
    %v65 = vadd.f32 %v64, %v54
    %66 = vadd.xlane.f32.xlu0 %v65
    %v67 = vpop.xlane.xlu0 %66
    %v68 = vadd.f32 %v55, %v56
    %v69 = vadd.f32 %v68, %v57
    %70 = vadd.xlane.f32.xlu0 %v69
    %v71 = vpop.xlane.xlu0 %70
    %v72 = vadd.f32 %v58, %v59
    %v73 = vadd.f32 %v72, %v60
    %74 = vadd.xlane.f32.xlu0 %v73
    %v75 = vpop.xlane.xlu0 %74
    %v76 = vadd.f32 %v61, %v62
    %v77 = vadd.f32 %v76, %v63
    %78 = vadd.xlane.f32.xlu0 %v77
    %v79 = vpop.xlane.xlu0 %78
    %v80 = vmul.f32 %v67, 0.003125
    %v81 = vmul.f32 %v71, 0.003125
    %v82 = vmul.f32 %v75, 0.003125
    %v83 = vmul.f32 %v79, 0.003125
    %v84 = vmul.f32 %v52, %v52
    %v85 = vmul.f32 %v53, %v53
    %v86 = vmul.f32 %v54, %v54
    %v87 = vmul.f32 %v55, %v55
    %v88 = vmul.f32 %v56, %v56
    %v89 = vmul.f32 %v57, %v57
    %v90 = vmul.f32 %v58, %v58
    %v91 = vmul.f32 %v59, %v59
    %v92 = vmul.f32 %v60, %v60
    %v93 = vmul.f32 %v61, %v61
    %v94 = vmul.f32 %v62, %v62
    %v95 = vmul.f32 %v63, %v63
    %v96 = vadd.f32 %v84, %v85
    %v97 = vadd.f32 %v96, %v86
    %98 = vadd.xlane.f32.xlu0 %v97
    %v99 = vpop.xlane.xlu0 %98
    %v100 = vadd.f32 %v87, %v88
    %v101 = vadd.f32 %v100, %v89
    %102 = vadd.xlane.f32.xlu0 %v101
    %v103 = vpop.xlane.xlu0 %102
    %v104 = vadd.f32 %v90, %v91
    %v105 = vadd.f32 %v104, %v92
    %106 = vadd.xlane.f32.xlu0 %v105
    %v107 = vpop.xlane.xlu0 %106
    %v108 = vadd.f32 %v93, %v94
    %v109 = vadd.f32 %v108, %v95
    %110 = vadd.xlane.f32.xlu0 %v109
    %v111 = vpop.xlane.xlu0 %110
    %v112 = vmul.f32 %v99, 0.003125
    %v113 = vmul.f32 %v103, 0.003125
    %v114 = vmul.f32 %v107, 0.003125
    %v115 = vmul.f32 %v111, 0.003125
    %v116 = vmul.f32 %v80, %v80
    %v117 = vmul.f32 %v81, %v81
    %v118 = vmul.f32 %v82, %v82
    %v119 = vmul.f32 %v83, %v83
    %v120 = vsub.f32 %v112, %v116
    %v121 = vsub.f32 %v113, %v117
    %v122 = vsub.f32 %v114, %v118
    %v123 = vsub.f32 %v115, %v119
    %v124 = vmax.f32 %v120, 0.0
    %v125 = vmax.f32 %v121, 0.0
    %v126 = vmax.f32 %v122, 0.0
    %v127 = vmax.f32 %v123, 0.0
    %v128 = vsub.f32 %v52, %v80
    %v129 = vsub.f32 %v53, %v80
    %v130 = vsub.f32 %v54, %v80
    %v131 = vsub.f32 %v55, %v81
    %v132 = vsub.f32 %v56, %v81
    %v133 = vsub.f32 %v57, %v81
    %v134 = vsub.f32 %v58, %v82
    %v135 = vsub.f32 %v59, %v82
    %v136 = vsub.f32 %v60, %v82
    %v137 = vsub.f32 %v61, %v83
    %v138 = vsub.f32 %v62, %v83
    %v139 = vsub.f32 %v63, %v83
    %v140 = vadd.f32 %v124, 1e-05
    %v141 = vadd.f32 %v125, 1e-05
    %v142 = vadd.f32 %v126, 1e-05
    %v143 = vadd.f32 %v127, 1e-05
    %v144 = vrsqrt.pop %v140
    %v145 = vrsqrt.pop %v141
    %v146 = vrsqrt.pop %v142
    %v147 = vrsqrt.pop %v143
    %v148 = vmul.f32 %v128, %v144
    %v149 = vmul.f32 %v129, %v144
    %v150 = vmul.f32 %v130, %v144
    %v151 = vmul.f32 %v131, %v145
    %v152 = vmul.f32 %v132, %v145
    %v153 = vmul.f32 %v133, %v145
    %v154 = vmul.f32 %v134, %v146
    %v155 = vmul.f32 %v135, %v146
    %v156 = vmul.f32 %v136, %v146
    %v157 = vmul.f32 %v137, %v147
    %v158 = vmul.f32 %v138, %v147
    %v159 = vmul.f32 %v139, %v147
    %v160 = vpack.c.bf16 %v151, %v148
    %v161 = vpack.c.bf16 %v152, %v149
    %v162 = vpack.c.bf16 %v153, %v150
    %v163 = vpack.c.bf16 %v157, %v154
    %v164 = vpack.c.bf16 %v158, %v155
    %v165 = vpack.c.bf16 %v159, %v156
    %v166 = vld [vmem:[#allocation5] sm:$0xf]
    %v167 = vld [vmem:[#allocation5 + $0x4] sm:$0xf]
    %v168 = vld [vmem:[#allocation5 + $0x8] sm:$0xf]
    %v169 = vld [vmem:[#allocation5 + $0xc] sm:$0xf]
    %v170 = vld [vmem:[#allocation5 + $0x10] sm:$0xf]
    %v171 = vld [vmem:[#allocation5 + $0x14] sm:$0xf]
    %v172 = vld [vmem:[#allocation5 + $0x18] sm:$0xf]
    %v173 = vld [vmem:[#allocation5 + $0x1c] sm:$0xf]
    %v174 = vld [vmem:[#allocation5 + $0x20] sm:$0xf]
    %v175 = vld [vmem:[#allocation5 + $0x24] sm:$0xf]
    %v176 = vld [vmem:[#allocation5 + $0x28] sm:$0xf]
    %v177 = vld [vmem:[#allocation5 + $0x2c] sm:$0xf]
    %v178 = vld [vmem:[#allocation5 + $0x30] sm:$0xf]
    %v179 = vld [vmem:[#allocation5 + $0x34] sm:$0xf]
    %v180 = vld [vmem:[#allocation5 + $0x38] sm:$0xf]
    %v181 = vld [vmem:[#allocation5 + $0x3c] sm:$0xf]
    %v182 = vld [vmem:[#allocation5 + $0x40] sm:$0xf]
    %v183 = vld [vmem:[#allocation5 + $0x44] sm:$0xf]
    %v184 = vld [vmem:[#allocation5 + $0x48] sm:$0xf]
    %v185 = vld [vmem:[#allocation5 + $0x4c] sm:$0xf]
    %v186 = vld [vmem:[#allocation5 + $0x50] sm:$0xf]
    %v187 = vld [vmem:[#allocation5 + $0x54] sm:$0xf]
    %v188 = vld [vmem:[#allocation5 + $0x58] sm:$0xf]
    %v189 = vld [vmem:[#allocation5 + $0x5c] sm:$0xf]
    %v190 = vld [vmem:[#allocation5 + $0x60] sm:$0xf]
    %v191 = vld [vmem:[#allocation5 + $0x64] sm:$0xf]
    %v192 = vld [vmem:[#allocation5 + $0x68] sm:$0xf]
    %v193 = vld [vmem:[#allocation5 + $0x6c] sm:$0xf]
    %v194 = vld [vmem:[#allocation5 + $0x70] sm:$0xf]
    %v195 = vld [vmem:[#allocation5 + $0x74] sm:$0xf]
    %v196 = vld [vmem:[#allocation5 + $0x78] sm:$0xf]
    %v197 = vld [vmem:[#allocation5 + $0x7c] sm:$0xf]
    %v198 = vld [vmem:[#allocation5 + $0x80] sm:$0xf]
    %v199 = vld [vmem:[#allocation5 + $0x84] sm:$0xf]
    %v200 = vld [vmem:[#allocation5 + $0x88] sm:$0xf]
    %v201 = vld [vmem:[#allocation5 + $0x8c] sm:$0xf]
    %v202 = vld [vmem:[#allocation5 + $0x90] sm:$0xf]
    %v203 = vld [vmem:[#allocation5 + $0x94] sm:$0xf]
    %v204 = vld [vmem:[#allocation5 + $0x98] sm:$0xf]
    %v205 = vld [vmem:[#allocation5 + $0x9c] sm:$0xf]
    %v206 = vld [vmem:[#allocation5 + $0xa0] sm:$0xf]
    %v207 = vld [vmem:[#allocation5 + $0xa4] sm:$0xf]
    %v208 = vld [vmem:[#allocation5 + $0xa8] sm:$0xf]
    %v209 = vld [vmem:[#allocation5 + $0xac] sm:$0xf]
    %v210 = vld [vmem:[#allocation5 + $0xb0] sm:$0xf]
    %v211 = vld [vmem:[#allocation5 + $0xb4] sm:$0xf]
    %v212 = vld [vmem:[#allocation5 + $0xb8] sm:$0xf]
    %v213 = vld [vmem:[#allocation5 + $0xbc] sm:$0xf]
    %v214 = vld [vmem:[%s2] sm:$0x1]
    %v216 = vlaneseq
    %v217 = vshrl.u32 %v216, 7
    %v218 = vsub.s32 0, %v217
    %v219 = vrot.slane %v214, %v218
    %v269 = vunpack.c.l.b16 %v166
    %v270 = vunpack.c.l.b16 %v167
    %v271 = vunpack.c.l.b16 %v168
    %v272 = vunpack.c.l.b16 %v169
    %v273 = vunpack.c.l.b16 %v170
    %v274 = vunpack.c.l.b16 %v171
    %v275 = vunpack.c.l.b16 %v172
    %v276 = vunpack.c.l.b16 %v173
    %v277 = vunpack.c.l.b16 %v174
    %v278 = vunpack.c.l.b16 %v175
    %v279 = vunpack.c.l.b16 %v176
    %v280 = vunpack.c.l.b16 %v177
    %v281 = vunpack.c.l.b16 %v178
    %v282 = vunpack.c.l.b16 %v179
    %v283 = vunpack.c.l.b16 %v180
    %v284 = vunpack.c.l.b16 %v181
    %v285 = vunpack.c.l.b16 %v182
    %v286 = vunpack.c.l.b16 %v183
    %v287 = vunpack.c.l.b16 %v184
    %v288 = vunpack.c.l.b16 %v185
    %v289 = vunpack.c.l.b16 %v186
    %v290 = vunpack.c.l.b16 %v187
    %v291 = vunpack.c.l.b16 %v188
    %v292 = vunpack.c.l.b16 %v189
    %v293 = vunpack.c.l.b16 %v190
    %v294 = vunpack.c.l.b16 %v191
    %v295 = vunpack.c.l.b16 %v192
    %v296 = vunpack.c.l.b16 %v193
    %v297 = vunpack.c.l.b16 %v194
    %v298 = vunpack.c.l.b16 %v195
    %v299 = vunpack.c.l.b16 %v196
    %v300 = vunpack.c.l.b16 %v197
    %v301 = vunpack.c.l.b16 %v198
    %v302 = vunpack.c.l.b16 %v199
    %v303 = vunpack.c.l.b16 %v200
    %v304 = vunpack.c.l.b16 %v201
    %v305 = vunpack.c.l.b16 %v202
    %v306 = vunpack.c.l.b16 %v203
    %v307 = vunpack.c.l.b16 %v204
    %v308 = vunpack.c.l.b16 %v205
    %v309 = vunpack.c.l.b16 %v206
    %v310 = vunpack.c.l.b16 %v207
    %v311 = vunpack.c.l.b16 %v208
    %v312 = vunpack.c.l.b16 %v209
    %v313 = vunpack.c.l.b16 %v210
    %v314 = vunpack.c.l.b16 %v211
    %v315 = vunpack.c.l.b16 %v212
    %v316 = vunpack.c.l.b16 %v213
    %v317 = vpack.c.b16 %v270, %v269
    %v318 = vpack.c.b16 %v272, %v271
    %v319 = vpack.c.b16 %v274, %v273
    %v320 = vpack.c.b16 %v276, %v275
    %v321 = vpack.c.b16 %v278, %v277
    %v322 = vpack.c.b16 %v280, %v279
    %v323 = vpack.c.b16 %v282, %v281
    %v324 = vpack.c.b16 %v284, %v283
    %v325 = vpack.c.b16 %v286, %v285
    %v326 = vpack.c.b16 %v288, %v287
    %v327 = vpack.c.b16 %v290, %v289
    %v328 = vpack.c.b16 %v292, %v291
    %v329 = vpack.c.b16 %v294, %v293
    %v330 = vpack.c.b16 %v296, %v295
    %v331 = vpack.c.b16 %v298, %v297
    %v332 = vpack.c.b16 %v300, %v299
    %v333 = vpack.c.b16 %v302, %v301
    %v334 = vpack.c.b16 %v304, %v303
    %v335 = vpack.c.b16 %v306, %v305
    %v336 = vpack.c.b16 %v308, %v307
    %v337 = vpack.c.b16 %v310, %v309
    %v338 = vpack.c.b16 %v312, %v311
    %v339 = vpack.c.b16 %v314, %v313
    %v340 = vpack.c.b16 %v316, %v315
    %365 = vmatprep.subr.bf16.mxu0 0
    %366 = vmatpush1.bf16.msra.mxu0 %v317
    %367 = vmatprep.subr.bf16.mxu0 0
    %368 = vmatpush1.bf16.msra.mxu0 %v318
    %369 = vmatprep.subr.bf16.mxu0 0
    %370 = vmatpush1.bf16.msra.mxu0 %v319
    %371 = vmatprep.subr.bf16.mxu0 0
    %372 = vmatpush1.bf16.msra.mxu0 %v320
    %373 = vmatprep.subr.bf16.mxu0 0
    %374 = vmatpush1.bf16.msra.mxu0 %v321
    %375 = vmatprep.subr.bf16.mxu0 0
    %376 = vmatpush1.bf16.msra.mxu0 %v322
    %377 = vmatprep.subr.bf16.mxu0 0
    %378 = vmatpush1.bf16.msra.mxu0 %v323
    %379 = vmatprep.subr.bf16.mxu0 0
    %380 = vmatpush1.bf16.msra.mxu0 %v324
    %381 = vmatprep.subr.bf16.mxu0 0
    %382 = vmatpush1.bf16.msra.mxu0 %v325
    %383 = vmatprep.subr.bf16.mxu0 0
    %384 = vmatpush1.bf16.msra.mxu0 %v326
    %385 = vmatprep.subr.bf16.mxu0 0
    %386 = vmatpush1.bf16.msra.mxu0 %v327
    %387 = vmatprep.subr.bf16.mxu0 0
    %388 = vmatpush1.bf16.msra.mxu0 %v328
    %389 = vmatprep.subr.bf16.mxu0 0
    %390 = vmatpush1.bf16.msra.mxu0 %v329
    %391 = vmatprep.subr.bf16.mxu0 0
    %392 = vmatpush1.bf16.msra.mxu0 %v330
    %393 = vmatprep.subr.bf16.mxu0 0
    %394 = vmatpush1.bf16.msra.mxu0 %v331
    %395 = vmatprep.subr.bf16.mxu0 0
    %396 = vmatpush1.bf16.msra.mxu0 %v332
    %397 = vmatprep.mubr.bf16.mxu0 %v161
    %398 = vmatmul.mubr.bf16.gmra.mrb[0].mxu0 %v160
    %v399 = vpop.f32.mrb[0].mxu0
    %v400 = vadd.f32 %v219, %v399
    %v401 = vpop.f32.mrb[0].mxu0
    %v402 = vpop.f32.mrb[0].mxu0
    %v403 = vadd.f32 %v219, %v402
    %v404 = vpop.f32.mrb[0].mxu0
    %405 = vmatprep.mubr.bf16.mxu0 %v164
    %406 = vmatmul.mubr.bf16.gmra.mrb[0].mxu0 %v163
    %v407 = vpop.f32.mrb[0].mxu0
    %v408 = vadd.f32 %v219, %v407
    %v409 = vpop.f32.mrb[0].mxu0
    %v410 = vpop.f32.mrb[0].mxu0
    %v411 = vadd.f32 %v219, %v410
    %v412 = vpop.f32.mrb[0].mxu0
    %413 = vdwg.mxu0
    %414 = vmatprep.subr.bf16.mxu0 0
    %415 = vmatpush1.bf16.msra.mxu0 %v333
    %416 = vmatprep.subr.bf16.mxu0 0
    %417 = vmatpush1.bf16.msra.mxu0 %v334
    %418 = vmatprep.subr.bf16.mxu0 0
    %419 = vmatpush1.bf16.msra.mxu0 %v335
    %420 = vmatprep.subr.bf16.mxu0 0
    %421 = vmatpush1.bf16.msra.mxu0 %v336
    %422 = vmatprep.subr.bf16.mxu0 0
    %423 = vmatpush1.bf16.msra.mxu0 %v337
    %424 = vmatprep.subr.bf16.mxu0 0
    %425 = vmatpush1.bf16.msra.mxu0 %v338
    %426 = vmatprep.subr.bf16.mxu0 0
    %427 = vmatpush1.bf16.msra.mxu0 %v339
    %428 = vmatprep.subr.bf16.mxu0 0
    %429 = vmatpush1.bf16.msra.mxu0 %v340
    %430 = vmatprep.subr.bf16.mxu0 0
    %431 = vmatpush1.bf16.msra.mxu0 0
    %432 = vmatprep.subr.bf16.mxu0 0
    %433 = vmatpush1.bf16.msra.mxu0 0
    %434 = vmatprep.subr.bf16.mxu0 0
    %435 = vmatpush1.bf16.msra.mxu0 0
    %436 = vmatprep.subr.bf16.mxu0 0
    %437 = vmatpush1.bf16.msra.mxu0 0
    %438 = vmatprep.subr.bf16.mxu0 0
    %439 = vmatpush1.bf16.msra.mxu0 0
    %440 = vmatprep.subr.bf16.mxu0 0
    %441 = vmatpush1.bf16.msra.mxu0 0
    %442 = vmatprep.subr.bf16.mxu0 0
    %443 = vmatpush1.bf16.msra.mxu0 0
    %444 = vmatprep.subr.bf16.mxu0 0
    %445 = vmatpush1.bf16.msra.mxu0 0
    %446 = vmatprep.mubr.bf16.mxu0 0
    %447 = vmatmul.mubr.bf16.gmra.mrb[0].mxu0 %v162
    %v448 = vpop.f32.mrb[0].mxu0
    %v449 = vadd.f32 %v400, %v448
    %v450 = vpop.f32.mrb[0].mxu0
    %v451 = vpop.f32.mrb[0].mxu0
    %v452 = vadd.f32 %v403, %v451
    %v453 = vpop.f32.mrb[0].mxu0
    %454 = vmatprep.mubr.bf16.mxu0 0
    %455 = vmatmul.mubr.bf16.gmra.mrb[0].mxu0 %v165
    %v456 = vpop.f32.mrb[0].mxu0
    %v457 = vadd.f32 %v408, %v456
    %v458 = vpop.f32.mrb[0].mxu0
    %v459 = vpop.f32.mrb[0].mxu0
    %v460 = vadd.f32 %v411, %v459
    %v461 = vpop.f32.mrb[0].mxu0
    %462 = vdwg.mxu0
    %v463 = vpack.c.bf16 %v452, %v449
    %v464 = vpack.c.bf16 %v460, %v457
    %v467 = vunpack.c.l.b16 %v463
    %v468 = vunpack.c.h.b16 %v463
    %v469 = vunpack.c.l.b16 %v464
    %v470 = vunpack.c.h.b16 %v464
    %v471 = vpack.c.b16 %v467, %v467
    %v472 = vpack.c.b16 %v468, %v468
    %v473 = vpack.c.b16 %v469, %v469
    %v474 = vpack.c.b16 %v470, %v470
    %479 = vst [vmem:[#allocation7] sm:$0xf] %v471
    %480 = vst [vmem:[#allocation7 + $0x4] sm:$0xf] %v472
    %481 = vst [vmem:[#allocation7 + $0x8] sm:$0xf] %v473
    %482 = vst [vmem:[#allocation7 + $0xc] sm:$0xf] %v474
    // Predicated region
    $region22: #{tpu_custom_call.1} parent=1 // pred_check
      _
    $region23: #{tpu_custom_call.1} parent=1 // pred_check_branch
      %484 = sbr.rel (0) target = $region25
    $region24: #{tpu_custom_call.1} parent=1 // pred_region
      %s486 = ssub.s32 256, 256
      %487 = vsyncadd [#allocation4], %s486
      %s488 = sshll.u32 [#allocation7], 4
      %s489 = int_to_ptr.vmem [resolvable:$true] %s488
      %494 = dma.vmem_to_hbm [thread:$0]  %s489, 256, %s3, [#allocation4], 64, 64, 4
    $region25: #{tpu_custom_call.1} parent=1 // pred_fallthru
      _
    // Predicated region
    $region26: #{tpu_custom_call.1} parent=1 // pred_check
      _
    $region27: #{tpu_custom_call.1} parent=1 // pred_check_branch
      %496 = sbr.rel (0) target = $region29
    $region28: #{tpu_custom_call.1} parent=1 // pred_region
      %497 = dma.done [#allocation4], 256
    $region29: #{tpu_custom_call.1} parent=1 // pred_fallthru
      _
    %498 = vsyncpa [#allocation3], 1
    %499 = vsyncpa [#allocation6], 1
    %500 = vsyncpa [#allocation4], 1

// kernel: tpu_custom_call.1
$region0: #{tpu_custom_call.1}
  #allocation0 [shape = 'u32[]', space=smem, size = 0x4, offset = 0x4, fixed_abs, tag = 'smem constant byte address 0x4 - core index']
  #allocation1 [shape = 'u32[144,128]{1,0:T(1,128)}', space=vmem, size = 0x12000, scoped, tag = 'internal scratch']
  %s0 = inlined_call_operand.hbm [shape: bf16[32,384], index: 0, kind: input, shape index: {}]
  %s1 = inlined_call_operand.hbm [shape: bf16[384,128], index: 1, kind: input, shape index: {}]
  %s2 = inlined_call_operand.vmem [shape: f32[1,128], index: 2, kind: input, shape index: {}]
  %s3 = inlined_call_operand.hbm [shape: bf16[32,128], index: 3, kind: output, shape index: {}]
  %s4 = sld [smem:[#allocation0]]
  $region30: #{tpu_custom_call.1} parent=0
    _
  %s6 = ssub.s32 1, %s4
  %s7 = scalar_select 0, %s6, %s4
  $region1: #{tpu_custom_call.1} parent=0
    #allocation2 [shape = 'u8[24576]{0}', space=vmem, size = 0x6000, scoped, tag = 'input window, operand 0, single buffered']
    #allocation3 [shape = 's32[1]{0}', space=sflag, size = 0x4, scoped, tag = 'scoped memory for tpu_custom_call.1']
    #allocation4 [shape = 's32[1]{0}', space=sflag, size = 0x4, scoped, tag = 'scoped memory for tpu_custom_call.1']
    #allocation5 [shape = 'u8[98304]{0}', space=vmem, size = 0x18000, scoped, tag = 'input window, operand 1, single buffered']
    #allocation6 [shape = 's32[1]{0}', space=sflag, size = 0x4, scoped, tag = 'scoped memory for tpu_custom_call.1']
    #allocation7 [shape = 'u8[8192]{0}', space=vmem, size = 0x2000, scoped, tag = 'output window, operand 0, single buffered']
    %8 = vsyncpa [#allocation3], 0
    %9 = vsyncpa [#allocation6], 0
    %10 = vsyncpa [#allocation4], 0
    // Predicated region
    $region2: #{tpu_custom_call.1} parent=1 // pred_check
      _
    $region3: #{tpu_custom_call.1} parent=1 // pred_check_branch
      %12 = sbr.rel (0) target = $region5
    $region4: #{tpu_custom_call.1} parent=1 // pred_region
      %s14 = ssub.s32 768, 768
      %15 = vsyncadd [#allocation3], %s14
      %s16 = sshll.u32 [#allocation2], 4
      %s17 = int_to_ptr.vmem [resolvable:$true] %s16
      %22 = dma.hbm_to_vmem [thread:$0]  %s0, 768, %s17, [#allocation3], 192, 192, 12
    $region5: #{tpu_custom_call.1} parent=1 // pred_fallthru
      _
    // Predicated region
    $region6: #{tpu_custom_call.1} parent=1 // pred_check
      _
    $region7: #{tpu_custom_call.1} parent=1 // pred_check_branch
      %24 = sbr.rel (0) target = $region9
    $region8: #{tpu_custom_call.1} parent=1 // pred_region
      %s26 = ssub.s32 3072, 3072
      %27 = vsyncadd [#allocation6], %s26
      %s28 = sshll.u32 [#allocation5], 4
      %s29 = int_to_ptr.vmem [resolvable:$true] %s28
      %34 = dma.hbm_to_vmem [thread:$0]  %s1, 3072, %s29, [#allocation6], 64, 64, 4
    $region9: #{tpu_custom_call.1} parent=1 // pred_fallthru
      _
    // Predicated region
    $region10: #{tpu_custom_call.1} parent=1 // pred_check
      _
    $region11: #{tpu_custom_call.1} parent=1 // pred_check_branch
      %36 = sbr.rel (0) target = $region13
    $region12: #{tpu_custom_call.1} parent=1 // pred_region
      _
    $region13: #{tpu_custom_call.1} parent=1 // pred_fallthru
      _
    // Predicated region
    $region14: #{tpu_custom_call.1} parent=1 // pred_check
      _
    $region15: #{tpu_custom_call.1} parent=1 // pred_check_branch
      %38 = sbr.rel (0) target = $region17
    $region16: #{tpu_custom_call.1} parent=1 // pred_region
      %39 = dma.done [#allocation3], 768
    $region17: #{tpu_custom_call.1} parent=1 // pred_fallthru
      _
    // Predicated region
    $region18: #{tpu_custom_call.1} parent=1 // pred_check
      _
    $region19: #{tpu_custom_call.1} parent=1 // pred_check_branch
      %41 = sbr.rel (0) target = $region21
    $region20: #{tpu_custom_call.1} parent=1 // pred_region
      %42 = dma.done [#allocation6], 3072
    $region21: #{tpu_custom_call.1} parent=1 // pred_fallthru
      _
    %v44 = vld [vmem:[#allocation2] sm:$0xff]
    %v45 = vld [vmem:[#allocation2 + $0x8] sm:$0xf]
    %v46 = vld [vmem:[#allocation2 + $0xc] sm:$0xff]
    %v47 = vld [vmem:[#allocation2 + $0x14] sm:$0xf]
    %v48 = vld [vmem:[#allocation2 + $0x18] sm:$0xff]
    %v49 = vld [vmem:[#allocation2 + $0x20] sm:$0xf]
    %v50 = vld [vmem:[#allocation2 + $0x24] sm:$0xff]
    %v51 = vld [vmem:[#allocation2 + $0x2c] sm:$0xf]
    %v52 = vunpack.c.l.bf16 %v44
    %v53 = vunpack.c.h.bf16 %v44
    %v54 = vunpack.c.l.bf16 %v45
    %v55 = vunpack.c.l.bf16 %v46
    %v56 = vunpack.c.h.bf16 %v46
    %v57 = vunpack.c.l.bf16 %v47
    %v58 = vunpack.c.l.bf16 %v48
    %v59 = vunpack.c.h.bf16 %v48
    %v60 = vunpack.c.l.bf16 %v49
    %v61 = vunpack.c.l.bf16 %v50
    %v62 = vunpack.c.h.bf16 %v50
    %v63 = vunpack.c.l.bf16 %v51
    %v64 = vadd.f32 %v52, %v53
    %v65 = vadd.f32 %v64, %v54
    %66 = vadd.xlane.f32.xlu0 %v65
    %v67 = vpop.xlane.xlu0 %66
    %v68 = vadd.f32 %v55, %v56
    %v69 = vadd.f32 %v68, %v57
    %70 = vadd.xlane.f32.xlu0 %v69
    %v71 = vpop.xlane.xlu0 %70
    %v72 = vadd.f32 %v58, %v59
    %v73 = vadd.f32 %v72, %v60
    %74 = vadd.xlane.f32.xlu0 %v73
    %v75 = vpop.xlane.xlu0 %74
    %v76 = vadd.f32 %v61, %v62
    %v77 = vadd.f32 %v76, %v63
    %78 = vadd.xlane.f32.xlu0 %v77
    %v79 = vpop.xlane.xlu0 %78
    %v80 = vmul.f32 %v67, 0.003125
    %v81 = vmul.f32 %v71, 0.003125
    %v82 = vmul.f32 %v75, 0.003125
    %v83 = vmul.f32 %v79, 0.003125
    %v84 = vmul.f32 %v52, %v52
    %v85 = vmul.f32 %v53, %v53
    %v86 = vmul.f32 %v54, %v54
    %v87 = vmul.f32 %v55, %v55
    %v88 = vmul.f32 %v56, %v56
    %v89 = vmul.f32 %v57, %v57
    %v90 = vmul.f32 %v58, %v58
    %v91 = vmul.f32 %v59, %v59
    %v92 = vmul.f32 %v60, %v60
    %v93 = vmul.f32 %v61, %v61
    %v94 = vmul.f32 %v62, %v62
    %v95 = vmul.f32 %v63, %v63
    %v96 = vadd.f32 %v84, %v85
    %v97 = vadd.f32 %v96, %v86
    %98 = vadd.xlane.f32.xlu0 %v97
    %v99 = vpop.xlane.xlu0 %98
    %v100 = vadd.f32 %v87, %v88
    %v101 = vadd.f32 %v100, %v89
    %102 = vadd.xlane.f32.xlu0 %v101
    %v103 = vpop.xlane.xlu0 %102
    %v104 = vadd.f32 %v90, %v91
    %v105 = vadd.f32 %v104, %v92
    %106 = vadd.xlane.f32.xlu0 %v105
    %v107 = vpop.xlane.xlu0 %106
    %v108 = vadd.f32 %v93, %v94
    %v109 = vadd.f32 %v108, %v95
    %110 = vadd.xlane.f32.xlu0 %v109
    %v111 = vpop.xlane.xlu0 %110
    %v112 = vmul.f32 %v99, 0.003125
    %v113 = vmul.f32 %v103, 0.003125
    %v114 = vmul.f32 %v107, 0.003125
    %v115 = vmul.f32 %v111, 0.003125
    %v116 = vmul.f32 %v80, %v80
    %v117 = vmul.f32 %v81, %v81
    %v118 = vmul.f32 %v82, %v82
    %v119 = vmul.f32 %v83, %v83
    %v120 = vsub.f32 %v112, %v116
    %v121 = vsub.f32 %v113, %v117
    %v122 = vsub.f32 %v114, %v118
    %v123 = vsub.f32 %v115, %v119
    %v124 = vmax.f32 %v120, 0.0
    %v125 = vmax.f32 %v121, 0.0
    %v126 = vmax.f32 %v122, 0.0
    %v127 = vmax.f32 %v123, 0.0
    %v128 = vsub.f32 %v52, %v80
    %v129 = vsub.f32 %v53, %v80
    %v130 = vsub.f32 %v54, %v80
    %v131 = vsub.f32 %v55, %v81
    %v132 = vsub.f32 %v56, %v81
    %v133 = vsub.f32 %v57, %v81
    %v134 = vsub.f32 %v58, %v82
    %v135 = vsub.f32 %v59, %v82
    %v136 = vsub.f32 %v60, %v82
    %v137 = vsub.f32 %v61, %v83
    %v138 = vsub.f32 %v62, %v83
    %v139 = vsub.f32 %v63, %v83
    %v140 = vadd.f32 %v124, 1e-05
    %v141 = vadd.f32 %v125, 1e-05
    %v142 = vadd.f32 %v126, 1e-05
    %v143 = vadd.f32 %v127, 1e-05
    %v144 = vrsqrt.pop %v140
    %v145 = vrsqrt.pop %v141
    %v146 = vrsqrt.pop %v142
    %v147 = vrsqrt.pop %v143
    %v148 = vmul.f32 %v128, %v144
    %v149 = vmul.f32 %v129, %v144
    %v150 = vmul.f32 %v130, %v144
    %v151 = vmul.f32 %v131, %v145
    %v152 = vmul.f32 %v132, %v145
    %v153 = vmul.f32 %v133, %v145
    %v154 = vmul.f32 %v134, %v146
    %v155 = vmul.f32 %v135, %v146
    %v156 = vmul.f32 %v136, %v146
    %v157 = vmul.f32 %v137, %v147
    %v158 = vmul.f32 %v138, %v147
    %v159 = vmul.f32 %v139, %v147
    %v160 = vpack.c.bf16 %v151, %v148
    %v161 = vpack.c.bf16 %v152, %v149
    %v162 = vpack.c.bf16 %v153, %v150
    %v163 = vpack.c.bf16 %v157, %v154
    %v164 = vpack.c.bf16 %v158, %v155
    %v165 = vpack.c.bf16 %v159, %v156
    %v166 = vld [vmem:[#allocation5] sm:$0xf]
    %v167 = vld [vmem:[#allocation5 + $0x4] sm:$0xf]
    %v168 = vld [vmem:[#allocation5 + $0x8] sm:$0xf]
    %v169 = vld [vmem:[#allocation5 + $0xc] sm:$0xf]
    %v170 = vld [vmem:[#allocation5 + $0x10] sm:$0xf]
    %v171 = vld [vmem:[#allocation5 + $0x14] sm:$0xf]
    %v172 = vld [vmem:[#allocation5 + $0x18] sm:$0xf]
    %v173 = vld [vmem:[#allocation5 + $0x1c] sm:$0xf]
    %v174 = vld [vmem:[#allocation5 + $0x20] sm:$0xf]
    %v175 = vld [vmem:[#allocation5 + $0x24] sm:$0xf]
    %v176 = vld [vmem:[#allocation5 + $0x28] sm:$0xf]
    %v177 = vld [vmem:[#allocation5 + $0x2c] sm:$0xf]
    %v178 = vld [vmem:[#allocation5 + $0x30] sm:$0xf]
    %v179 = vld [vmem:[#allocation5 + $0x34] sm:$0xf]
    %v180 = vld [vmem:[#allocation5 + $0x38] sm:$0xf]
    %v181 = vld [vmem:[#allocation5 + $0x3c] sm:$0xf]
    %v182 = vld [vmem:[#allocation5 + $0x40] sm:$0xf]
    %v183 = vld [vmem:[#allocation5 + $0x44] sm:$0xf]
    %v184 = vld [vmem:[#allocation5 + $0x48] sm:$0xf]
    %v185 = vld [vmem:[#allocation5 + $0x4c] sm:$0xf]
    %v186 = vld [vmem:[#allocation5 + $0x50] sm:$0xf]
    %v187 = vld [vmem:[#allocation5 + $0x54] sm:$0xf]
    %v188 = vld [vmem:[#allocation5 + $0x58] sm:$0xf]
    %v189 = vld [vmem:[#allocation5 + $0x5c] sm:$0xf]
    %v190 = vld [vmem:[#allocation5 + $0x60] sm:$0xf]
    %v191 = vld [vmem:[#allocation5 + $0x64] sm:$0xf]
    %v192 = vld [vmem:[#allocation5 + $0x68] sm:$0xf]
    %v193 = vld [vmem:[#allocation5 + $0x6c] sm:$0xf]
    %v194 = vld [vmem:[#allocation5 + $0x70] sm:$0xf]
    %v195 = vld [vmem:[#allocation5 + $0x74] sm:$0xf]
    %v196 = vld [vmem:[#allocation5 + $0x78] sm:$0xf]
    %v197 = vld [vmem:[#allocation5 + $0x7c] sm:$0xf]
    %v198 = vld [vmem:[#allocation5 + $0x80] sm:$0xf]
    %v199 = vld [vmem:[#allocation5 + $0x84] sm:$0xf]
    %v200 = vld [vmem:[#allocation5 + $0x88] sm:$0xf]
    %v201 = vld [vmem:[#allocation5 + $0x8c] sm:$0xf]
    %v202 = vld [vmem:[#allocation5 + $0x90] sm:$0xf]
    %v203 = vld [vmem:[#allocation5 + $0x94] sm:$0xf]
    %v204 = vld [vmem:[#allocation5 + $0x98] sm:$0xf]
    %v205 = vld [vmem:[#allocation5 + $0x9c] sm:$0xf]
    %v206 = vld [vmem:[#allocation5 + $0xa0] sm:$0xf]
    %v207 = vld [vmem:[#allocation5 + $0xa4] sm:$0xf]
    %v208 = vld [vmem:[#allocation5 + $0xa8] sm:$0xf]
    %v209 = vld [vmem:[#allocation5 + $0xac] sm:$0xf]
    %v210 = vld [vmem:[#allocation5 + $0xb0] sm:$0xf]
    %v211 = vld [vmem:[#allocation5 + $0xb4] sm:$0xf]
    %v212 = vld [vmem:[#allocation5 + $0xb8] sm:$0xf]
    %v213 = vld [vmem:[#allocation5 + $0xbc] sm:$0xf]
    %v214 = vld [vmem:[%s2] sm:$0x1]
    %v216 = vlaneseq
    %v217 = vshrl.u32 %v216, 7
    %v218 = vsub.s32 0, %v217
    %v219 = vrot.slane %v214, %v218
    %v269 = vunpack.c.l.b16 %v166
    %v270 = vunpack.c.l.b16 %v167
    %v271 = vunpack.c.l.b16 %v168
    %v272 = vunpack.c.l.b16 %v169
    %v273 = vunpack.c.l.b16 %v170
    %v274 = vunpack.c.l.b16 %v171
    %v275 = vunpack.c.l.b16 %v172
    %v276 = vunpack.c.l.b16 %v173
    %v277 = vunpack.c.l.b16 %v174
    %v278 = vunpack.c.l.b16 %v175
    %v279 = vunpack.c.l.b16 %v176
    %v280 = vunpack.c.l.b16 %v177
    %v281 = vunpack.c.l.b16 %v178
    %v282 = vunpack.c.l.b16 %v179
    %v283 = vunpack.c.l.b16 %v180
    %v284 = vunpack.c.l.b16 %v181
    %v285 = vunpack.c.l.b16 %v182
    %v286 = vunpack.c.l.b16 %v183
    %v287 = vunpack.c.l.b16 %v184
    %v288 = vunpack.c.l.b16 %v185
    %v289 = vunpack.c.l.b16 %v186
    %v290 = vunpack.c.l.b16 %v187
    %v291 = vunpack.c.l.b16 %v188
    %v292 = vunpack.c.l.b16 %v189
    %v293 = vunpack.c.l.b16 %v190
    %v294 = vunpack.c.l.b16 %v191
    %v295 = vunpack.c.l.b16 %v192
    %v296 = vunpack.c.l.b16 %v193
    %v297 = vunpack.c.l.b16 %v194
    %v298 = vunpack.c.l.b16 %v195
    %v299 = vunpack.c.l.b16 %v196
    %v300 = vunpack.c.l.b16 %v197
    %v301 = vunpack.c.l.b16 %v198
    %v302 = vunpack.c.l.b16 %v199
    %v303 = vunpack.c.l.b16 %v200
    %v304 = vunpack.c.l.b16 %v201
    %v305 = vunpack.c.l.b16 %v202
    %v306 = vunpack.c.l.b16 %v203
    %v307 = vunpack.c.l.b16 %v204
    %v308 = vunpack.c.l.b16 %v205
    %v309 = vunpack.c.l.b16 %v206
    %v310 = vunpack.c.l.b16 %v207
    %v311 = vunpack.c.l.b16 %v208
    %v312 = vunpack.c.l.b16 %v209
    %v313 = vunpack.c.l.b16 %v210
    %v314 = vunpack.c.l.b16 %v211
    %v315 = vunpack.c.l.b16 %v212
    %v316 = vunpack.c.l.b16 %v213
    %v317 = vpack.c.b16 %v270, %v269
    %v318 = vpack.c.b16 %v272, %v271
    %v319 = vpack.c.b16 %v274, %v273
    %v320 = vpack.c.b16 %v276, %v275
    %v321 = vpack.c.b16 %v278, %v277
    %v322 = vpack.c.b16 %v280, %v279
    %v323 = vpack.c.b16 %v282, %v281
    %v324 = vpack.c.b16 %v284, %v283
    %v325 = vpack.c.b16 %v286, %v285
    %v326 = vpack.c.b16 %v288, %v287
    %v327 = vpack.c.b16 %v290, %v289
    %v328 = vpack.c.b16 %v292, %v291
    %v329 = vpack.c.b16 %v294, %v293
    %v330 = vpack.c.b16 %v296, %v295
    %v331 = vpack.c.b16 %v298, %v297
    %v332 = vpack.c.b16 %v300, %v299
    %v333 = vpack.c.b16 %v302, %v301
    %v334 = vpack.c.b16 %v304, %v303
    %v335 = vpack.c.b16 %v306, %v305
    %v336 = vpack.c.b16 %v308, %v307
    %v337 = vpack.c.b16 %v310, %v309
    %v338 = vpack.c.b16 %v312, %v311
    %v339 = vpack.c.b16 %v314, %v313
    %v340 = vpack.c.b16 %v316, %v315
    %365 = vmatprep.subr.bf16.mxu0 0
    %366 = vmatpush1.bf16.msra.mxu0 %v317
    %367 = vmatprep.subr.bf16.mxu0 0
    %368 = vmatpush1.bf16.msra.mxu0 %v318
    %369 = vmatprep.subr.bf16.mxu0 0
    %370 = vmatpush1.bf16.msra.mxu0 %v319
    %371 = vmatprep.subr.bf16.mxu0 0
    %372 = vmatpush1.bf16.msra.mxu0 %v320
    %373 = vmatprep.subr.bf16.mxu0 0
    %374 = vmatpush1.bf16.msra.mxu0 %v321
    %375 = vmatprep.subr.bf16.mxu0 0
    %376 = vmatpush1.bf16.msra.mxu0 %v322
    %377 = vmatprep.subr.bf16.mxu0 0
    %378 = vmatpush1.bf16.msra.mxu0 %v323
    %379 = vmatprep.subr.bf16.mxu0 0
    %380 = vmatpush1.bf16.msra.mxu0 %v324
    %381 = vmatprep.subr.bf16.mxu0 0
    %382 = vmatpush1.bf16.msra.mxu0 %v325
    %383 = vmatprep.subr.bf16.mxu0 0
    %384 = vmatpush1.bf16.msra.mxu0 %v326
    %385 = vmatprep.subr.bf16.mxu0 0
    %386 = vmatpush1.bf16.msra.mxu0 %v327
    %387 = vmatprep.subr.bf16.mxu0 0
    %388 = vmatpush1.bf16.msra.mxu0 %v328
    %389 = vmatprep.subr.bf16.mxu0 0
    %390 = vmatpush1.bf16.msra.mxu0 %v329
    %391 = vmatprep.subr.bf16.mxu0 0
    %392 = vmatpush1.bf16.msra.mxu0 %v330
    %393 = vmatprep.subr.bf16.mxu0 0
    %394 = vmatpush1.bf16.msra.mxu0 %v331
    %395 = vmatprep.subr.bf16.mxu0 0
    %396 = vmatpush1.bf16.msra.mxu0 %v332
    %397 = vmatprep.mubr.bf16.mxu0 %v161
    %398 = vmatmul.mubr.bf16.gmra.mrb[0].mxu0 %v160
    %v399 = vpop.f32.mrb[0].mxu0
    %v400 = vadd.f32 %v219, %v399
    %v401 = vpop.f32.mrb[0].mxu0
    %v402 = vpop.f32.mrb[0].mxu0
    %v403 = vadd.f32 %v219, %v402
    %v404 = vpop.f32.mrb[0].mxu0
    %405 = vmatprep.mubr.bf16.mxu0 %v164
    %406 = vmatmul.mubr.bf16.gmra.mrb[0].mxu0 %v163
    %v407 = vpop.f32.mrb[0].mxu0
    %v408 = vadd.f32 %v219, %v407
    %v409 = vpop.f32.mrb[0].mxu0
    %v410 = vpop.f32.mrb[0].mxu0
    %v411 = vadd.f32 %v219, %v410
    %v412 = vpop.f32.mrb[0].mxu0
    %413 = vdwg.mxu0
    %414 = vmatprep.subr.bf16.mxu0 0
    %415 = vmatpush1.bf16.msra.mxu0 %v333
    %416 = vmatprep.subr.bf16.mxu0 0
    %417 = vmatpush1.bf16.msra.mxu0 %v334
    %418 = vmatprep.subr.bf16.mxu0 0
    %419 = vmatpush1.bf16.msra.mxu0 %v335
    %420 = vmatprep.subr.bf16.mxu0 0
    %421 = vmatpush1.bf16.msra.mxu0 %v336
    %422 = vmatprep.subr.bf16.mxu0 0
    %423 = vmatpush1.bf16.msra.mxu0 %v337
    %424 = vmatprep.subr.bf16.mxu0 0
    %425 = vmatpush1.bf16.msra.mxu0 %v338
    %426 = vmatprep.subr.bf16.mxu0 0
    %427 = vmatpush1.bf16.msra.mxu0 %v339
    %428 = vmatprep.subr.bf16.mxu0 0
    %429 = vmatpush1.bf16.msra.mxu0 %v340
    %430 = vmatprep.subr.bf16.mxu0 0
    %431 = vmatpush1.bf16.msra.mxu0 0
    %432 = vmatprep.subr.bf16.mxu0 0
    %433 = vmatpush1.bf16.msra.mxu0 0
    %434 = vmatprep.subr.bf16.mxu0 0
    %435 = vmatpush1.bf16.msra.mxu0 0
    %436 = vmatprep.subr.bf16.mxu0 0
    %437 = vmatpush1.bf16.msra.mxu0 0
    %438 = vmatprep.subr.bf16.mxu0 0
    %439 = vmatpush1.bf16.msra.mxu0 0
    %440 = vmatprep.subr.bf16.mxu0 0
    %441 = vmatpush1.bf16.msra.mxu0 0
    %442 = vmatprep.subr.bf16.mxu0 0
    %443 = vmatpush1.bf16.msra.mxu0 0
    %444 = vmatprep.subr.bf16.mxu0 0
    %445 = vmatpush1.bf16.msra.mxu0 0
    %446 = vmatprep.mubr.bf16.mxu0 0
    %447 = vmatmul.mubr.bf16.gmra.mrb[0].mxu0 %v162
    %v448 = vpop.f32.mrb[0].mxu0
    %v449 = vadd.f32 %v400, %v448
    %v450 = vpop.f32.mrb[0].mxu0
    %v451 = vpop.f32.mrb[0].mxu0
    %v452 = vadd.f32 %v403, %v451
    %v453 = vpop.f32.mrb[0].mxu0
    %454 = vmatprep.mubr.bf16.mxu0 0
    %455 = vmatmul.mubr.bf16.gmra.mrb[0].mxu0 %v165
    %v456 = vpop.f32.mrb[0].mxu0
    %v457 = vadd.f32 %v408, %v456
    %v458 = vpop.f32.mrb[0].mxu0
    %v459 = vpop.f32.mrb[0].mxu0
    %v460 = vadd.f32 %v411, %v459
    %v461 = vpop.f32.mrb[0].mxu0
    %462 = vdwg.mxu0
    %v463 = vpack.c.bf16 %v452, %v449
    %v464 = vpack.c.bf16 %v460, %v457
    %v467 = vunpack.c.l.b16 %v463
    %v468 = vunpack.c.h.b16 %v463
    %v469 = vunpack.c.l.b16 %v464
    %v470 = vunpack.c.h.b16 %v464
    %v471 = vpack.c.b16 %v467, %v467
    %v472 = vpack.c.b16 %v468, %v468
    %v473 = vpack.c.b16 %v469, %v469
    %v474 = vpack.c.b16 %v470, %v470
    %479 = vst [vmem:[#allocation7] sm:$0xf] %v471
    %480 = vst [vmem:[#allocation7 + $0x4] sm:$0xf] %v472
    %481 = vst [vmem:[#allocation7 + $0x8] sm:$0xf] %v473
    %482 = vst [vmem:[#allocation7 + $0xc] sm:$0xf] %v474
    // Predicated region
    $region22: #{tpu_custom_call.1} parent=1 // pred_check
      _
    $region23: #{tpu_custom_call.1} parent=1 // pred_check_branch
      %484 = sbr.rel (0) target = $region25
    $region24: #{tpu_custom_call.1} parent=1 // pred_region
      %s486 = ssub.s32 256, 256
      %487 = vsyncadd [#allocation4], %s486
      %s488 = sshll.u32 [#allocation7], 4
      %s489 = int_to_ptr.vmem [resolvable:$true] %s488
      %494 = dma.vmem_to_hbm [thread:$0]  %s489, 256, %s3, [#allocation4], 64, 64, 4
    $region25: #{tpu_custom_call.1} parent=1 // pred_fallthru
      _
    // Predicated region
    $region26: #{tpu_custom_call.1} parent=1 // pred_check
      _
    $region27: #{tpu_custom_call.1} parent=1 // pred_check_branch
      %496 = sbr.rel (0) target = $region29
    $region28: #{tpu_custom_call.1} parent=1 // pred_region
      %497 = dma.done [#allocation4], 256
    $region29: #{tpu_custom_call.1} parent=1 // pred_fallthru
      _
    %498 = vsyncpa [#allocation3], 1
    %499 = vsyncpa [#allocation6], 1
    %500 = vsyncpa [#allocation4], 1

</llo_original>
